<compile_context>
chip_gen: v7x
topology: tpu7x:2x2x1
jax: 0.10.0
libtpu: 0.0.40
codegen_flags: <defaults>
</compile_context>

<pallas_src>
import functools

import jax
import jax.numpy as jnp
from jax.experimental import pallas as pl
from jax.experimental.pallas import tpu as pltpu

FP8_MAX = 448.0  # torch.finfo(torch.float8_e4m3fn).max == jnp.finfo(jnp.float8_e4m3fn).max


def _round_up(x, m):
    return ((x + m - 1) // m) * m


def _supports_native_fp8_mxu():
    """True on TPU generations whose MXU accepts fp8 operands directly (v7x+)."""
    try:
        kind = jax.devices()[0].device_kind.lower()
    except Exception:
        return False
    return ("v7" in kind) or ("7x" in kind) or ("tpu7" in kind)


def fp8_linear_kernel(scales_ref, x_ref, w_ref, *rest,
                      use_bias, apply_output_quant, acc_in_out, native_fp8):
    # scales_ref (SMEM, f32[3]): [input_scale*weight_scale, 1/output_scale, output_scale]
    if use_bias:
        b_ref, rest = rest[0], rest[1:]
    else:
        b_ref = None
    if acc_in_out:
        (o_ref,) = rest           # f32 output block doubles as the accumulator
        acc_ref = o_ref
    else:
        o_ref, acc_ref = rest     # separate f32 VMEM scratch accumulator

    k = pl.program_id(2)

    @pl.when(k == 0)
    def _init():
        acc_ref[...] = jnp.zeros_like(acc_ref)

    if native_fp8:
        # v7x: MXU consumes e4m3 directly; zero VPU cast ops per k-step.
        x_mx = x_ref[...]
        w_mx = w_ref[...]
    else:
        # v5e/v6e: single-step fp8 -> bf16 cast. e4m3 values (and their pairwise products)
        # are exactly representable in bf16, so bf16 MXU with f32 accumulation is lossless.
        x_mx = x_ref[...].astype(jnp.bfloat16)
        w_mx = w_ref[...] if w_ref.dtype == jnp.bfloat16 else w_ref[...].astype(jnp.bfloat16)
    acc_ref[...] += jnp.dot(x_mx, w_mx, preferred_element_type=jnp.float32)

    @pl.when(k == pl.num_programs(2) - 1)
    def _finalize():
        out = acc_ref[...] * scales_ref[0]          # dequant: fold (input_scale*weight_scale)
        if use_bias:
            out = out + b_ref[...]                  # bias exactly once, at k == last
        if apply_output_quant:
            # output fake-quant round-trip (the module's `if self.output_scale:` branch)
            q = jnp.clip(out * scales_ref[1], -FP8_MAX, FP8_MAX).astype(jnp.float8_e4m3fn)
            out = q.astype(jnp.float32) * scales_ref[2]
        o_ref[...] = out.astype(o_ref.dtype)


class FP8LinearStaticTPU:
    """JAX/Pallas equivalent of autosmoothquant FP8LinearStatic.

    All weight-side preparation (transpose to lane-dense (K, N), padding to tile multiples,
    optional bf16 pre-convert, bias padding, scale folding, static output-quant truthiness)
    happens once at construction; forward() only quantizes the activation and runs the
    tiled MXU kernel.
    """

    def __init__(self, weight_fp8, input_scale, weight_scale, output_scale, bias=None,
                 *, tm=512, tn=512, tk=1024, native_fp8=None, store_weight_bf16=False):
        N, K = weight_fp8.shape
        self.out_features, self.in_features = N, K
        self.use_bias = bias is not None

        self.native_fp8 = bool(_supports_native_fp8_mxu() if native_fp8 is None else native_fp8)

        # Static truthiness of the module's `if self.output_scale:` (output_scale is concrete
        # here, never a tracer — resolves the previous fragile bool(float(...)) default).
        self.apply_output_quant = bool(float(output_scale) != 0.0)

        in_s = jnp.asarray(input_scale, jnp.float32).reshape(())
        w_s = jnp.asarray(weight_scale, jnp.float32).reshape(())
        out_s = jnp.asarray(output_scale, jnp.float32).reshape(())
        inv_out_s = (jnp.float32(1.0) / out_s) if self.apply_output_quant else jnp.asarray(1.0, jnp.float32)
        self.scales = jnp.stack([in_s * w_s, inv_out_s, out_s]).astype(jnp.float32)
        self.inv_input_scale = jnp.float32(1.0) / in_s

        # ---- tile selection. fp8 operand tiling is (32, 128): tm % 32, tn % 128, tk % 128.
        # tn / tk are weight-shape dependent and frozen here; tm is clamped per call.
        self.tm_default = max(32, _round_up(tm, 32))
        tn = _round_up(min(tn, _round_up(N, 128)), 128)
        tk = _round_up(min(tk, _round_up(K, 128)), 128)
        # Megacore: keep >= 2 parallel output blocks even when M fits a single tm tile
        # (decode), so both TensorCores get work.
        if N >= 256:
            while tn > 128 and _round_up(N, tn) // tn < 2:
                tn = _round_up(tn // 2, 128)
        self.tn, self.tk = tn, tk
        Kp, Np = _round_up(K, tk), _round_up(N, tn)
        self.Kp, self.Np = Kp, Np

        # ---- weight: transpose ONCE to the canonical lane-dense (K, N) contraction layout
        # and pad to tile multiples (hoisted out of the forward path).
        wT = jnp.asarray(weight_fp8).T
        if (Kp, Np) != (K, N):
            wT = jnp.zeros((Kp, Np), dtype=weight_fp8.dtype).at[:K, :N].set(wT)
        if store_weight_bf16 and not self.native_fp8:
            # Optional compute-bound variant (large M only): skips the per-step weight cast at
            # the cost of 2x weight HBM traffic. Keep off for decode-size M.
            wT = wT.astype(jnp.bfloat16)
        self.wT = wT

        if self.use_bias:
            b = jnp.asarray(bias, jnp.float32).reshape(1, N)
            if Np != N:
                b = jnp.pad(b, ((0, 0), (0, Np - N)))
            self.bias = b
        else:
            self.bias = None

    def __call__(self, x):
        orig_shape = x.shape
        K, N = self.in_features, self.out_features
        assert orig_shape[-1] == K
        out_dtype = x.dtype
        x2d = x.reshape(-1, K)
        M = x2d.shape[0]
        if M == 0:
            # easy_fp8_gemm early-exit: empty result in out_dtype
            return jnp.zeros(orig_shape[:-1] + (N,), dtype=out_dtype)

        tn, tk, Kp, Np = self.tn, self.tk, self.Kp, self.Np
        tm = _round_up(min(self.tm_default, _round_up(M, 32)), 32)
        Mp = _round_up(M, tm)

        # (1) Static per-tensor fp8 quantization of the activation, once per call; pad the
        #     1-byte fp8 tensor afterwards (zero padding quantizes to zero, so padded K
        #     contributes nothing). Multiply by precomputed reciprocal — no divide, no
        #     standalone f32 materialization.
        q_x = jnp.clip(x2d * self.inv_input_scale, -FP8_MAX, FP8_MAX).astype(jnp.float8_e4m3fn)
        if (Mp, Kp) != (M, K):
            q_x = jnp.pad(q_x, ((0, Mp - M), (0, Kp - K)))

        grid = (Mp // tm, Np // tn, Kp // tk)
        acc_in_out = (out_dtype == jnp.float32)      # accumulate directly in the output block

        in_specs = [
            pl.BlockSpec(memory_space=pltpu.MemorySpace.SMEM),     # scales f32[3]
            pl.BlockSpec((tm, tk), lambda i, j, k: (i, k)),        # q_x  (Mp, Kp) fp8
            pl.BlockSpec((tk, tn), lambda i, j, k: (k, j)),        # wT   (Kp, Np) fp8/bf16
        ]
        operands = [self.scales, q_x, self.wT]
        if self.use_bias:
            in_specs.append(pl.BlockSpec((1, tn), lambda i, j, k: (0, j)))
            operands.append(self.bias)

        scratch_shapes = [] if acc_in_out else [pltpu.VMEM((tm, tn), jnp.float32)]

        out_itemsize = jnp.dtype(out_dtype).itemsize
        w_itemsize = jnp.dtype(self.wT.dtype).itemsize
        cost = pl.CostEstimate(
            flops=int(2 * Mp * Np * Kp),
            transcendentals=0,
            bytes_accessed=int(Mp * Kp * 1 * grid[1]              # x re-streamed per N tile
                               + Kp * Np * w_itemsize * grid[0]   # w re-streamed per M tile
                               + Mp * Np * out_itemsize
                               + (Np * 4 if self.use_bias else 0)),
        )

        # VMEM budget: double-buffered in/out tiles + accumulator + bf16 cast temporaries.
        # Cap at 64 MiB (v7x physical per-TC VMEM); floor at 32 MiB (covers v5e's 16 MiB default).
        vmem_est = (2 * (tm * tk * 1 + tk * tn * w_itemsize)
                    + 2 * tm * tn * out_itemsize
                    + tm * tn * 4
                    + (0 if self.native_fp8 else 2 * (tm * tk + tk * tn)))
        vmem_limit = int(min(max(32 << 20, 2 * vmem_est), 64 << 20))

        out_padded = pl.pallas_call(
            functools.partial(fp8_linear_kernel,
                              use_bias=self.use_bias,
                              apply_output_quant=self.apply_output_quant,
                              acc_in_out=acc_in_out,
                              native_fp8=self.native_fp8),
            out_shape=jax.ShapeDtypeStruct((Mp, Np), out_dtype),
            grid_spec=pltpu.PrefetchScalarGridSpec(
                num_scalar_prefetch=0,
                grid=grid,
                in_specs=in_specs,
                out_specs=pl.BlockSpec((tm, tn), lambda i, j, k: (i, j)),
                scratch_shapes=scratch_shapes,
            ),
            compiler_params=pltpu.CompilerParams(
                dimension_semantics=("parallel", "parallel", "arbitrary"),
                vmem_limit_bytes=vmem_limit),
            cost_estimate=cost,
        )(*operands)

        out2d = out_padded[:M, :N]
        return out2d.reshape(*orig_shape[:-1], N)


if __name__ == "__main__":
    # Deterministic synthetic parameters (module __init__ shapes):
    #   weight: (out_features, in_features) float8_e4m3fn
    #   bias:   (out_features,) float32        (use_bias=True here)
    #   weight_scale / input_scale / output_scale: scalar float32
    batch, seq, in_features, out_features = 2, 8, 32, 64
    key = jax.random.PRNGKey(0)
    kx, kw, kb = jax.random.split(key, 3)

    x = jax.random.normal(kx, (batch, seq, in_features), dtype=jnp.float32)

    w_f32 = jax.random.normal(kw, (out_features, in_features), dtype=jnp.float32) * 0.05
    weight_scale = jnp.max(jnp.abs(w_f32)) / FP8_MAX
    weight_fp8 = jnp.clip(w_f32 / weight_scale, -FP8_MAX, FP8_MAX).astype(jnp.float8_e4m3fn)

    bias = jax.random.normal(kb, (out_features,), dtype=jnp.float32) * 0.1

    input_scale = jnp.float32(0.02)
    output_scale = jnp.float32(0.1)

    layer = FP8LinearStaticTPU(weight_fp8, input_scale, weight_scale, output_scale, bias=bias)
    out = jax.block_until_ready(layer(x))
    assert out.shape == (batch, seq, out_features)
    assert out.dtype == x.dtype

    # Pure-JAX reference (mirrors the torch non-native fp8 path).
    qx_ref = jnp.clip(x / input_scale, -FP8_MAX, FP8_MAX).astype(jnp.float8_e4m3fn)
    deq_x = qx_ref.astype(jnp.float32) * input_scale
    deq_w = weight_fp8.astype(jnp.float32) * weight_scale
    ref = jnp.einsum("bsk,nk->bsn", deq_x, deq_w,
                     precision=jax.lax.Precision.HIGHEST) + bias
    qref = jnp.clip(ref / output_scale, -FP8_MAX, FP8_MAX).astype(jnp.float8_e4m3fn)
    ref = qref.astype(jnp.float32) * output_scale

    # Tolerant check: isolated fp8-rounding tie-breaks may differ by one e4m3 ULP.
    diff = jnp.abs(out - ref)
    frac_close = float(jnp.mean((diff <= 1e-3).astype(jnp.float32)))
    assert frac_close > 0.99 and float(jnp.max(diff)) < 0.2, (frac_close, float(jnp.max(diff)))

    print("KERNEL_OK")
</pallas_src>

<mosaic_0001>
module attributes {stable_mosaic.version = 11 : i64} {
  func.func @fp8_linear_kernel(%arg0: i32, %arg1: i32, %arg2: i32, %arg3: memref<3xf32, #tpu.memory_space<smem>>, %arg4: memref<32x128xf8E4M3FN, #tpu.memory_space<vmem>>, %arg5: memref<128x128xf8E4M3FN, #tpu.memory_space<vmem>>, %arg6: memref<1x128xf32, #tpu.memory_space<vmem>>, %arg7: memref<32x128xf32, #tpu.memory_space<vmem>>) attributes {dimension_semantics = [#tpu.dimension_semantics<parallel>, #tpu.dimension_semantics<parallel>, #tpu.dimension_semantics<arbitrary>], iteration_bounds = array<i64: 1, 1, 1>, scalar_prefetch = 0 : i64, scratch_operands = 0 : i64, tpu.core_type = #tpu.core_type<tc>, window_params = [{transform_indices = @transform_0, window_bounds = array<i64: 3>}, {transform_indices = @transform_1, window_bounds = array<i64: 32, 128>}, {transform_indices = @transform_2, window_bounds = array<i64: 128, 128>}, {transform_indices = @transform_3, window_bounds = array<i64: 1, 128>}, {transform_indices = @transform_4, window_bounds = array<i64: 32, 128>}]} {
    %c0_i32 = arith.constant 0 : i32
    %0 = arith.cmpi eq, %arg2, %c0_i32 : i32
    %1 = arith.extui %0 : i1 to i32
    %c0_i32_0 = arith.constant 0 : i32
    %2 = arith.cmpi ne, %1, %c0_i32_0 : i32
    scf.if %2 {
      %cst_10 = arith.constant 0.000000e+00 : f32
      %14 = vector.broadcast %cst_10 : f32 to vector<32x128xf32>
      %c0_11 = arith.constant 0 : index
      %c0_12 = arith.constant 0 : index
      %15 = vector.load %arg7[%c0_11, %c0_12] : memref<32x128xf32, #tpu.memory_space<vmem>>, vector<32x128xf32>
      tpu.vector_store %arg7[%c0_11, %c0_12], %14 {strides = array<i32>} : memref<32x128xf32, #tpu.memory_space<vmem>>, vector<32x128xf32>,
    } else {
    }
    %c0 = arith.constant 0 : index
    %c0_1 = arith.constant 0 : index
    %3 = vector.load %arg4[%c0, %c0_1] : memref<32x128xf8E4M3FN, #tpu.memory_space<vmem>>, vector<32x128xf8E4M3FN>
    %4 = arith.extf %3 : vector<32x128xf8E4M3FN> to vector<32x128xbf16>
    %c0_2 = arith.constant 0 : index
    %c0_3 = arith.constant 0 : index
    %5 = vector.load %arg5[%c0_2, %c0_3] : memref<128x128xf8E4M3FN, #tpu.memory_space<vmem>>, vector<128x128xf8E4M3FN>
    %6 = arith.extf %5 : vector<128x128xf8E4M3FN> to vector<128x128xbf16>
    %c0_4 = arith.constant 0 : index
    %c0_5 = arith.constant 0 : index
    %7 = vector.load %arg7[%c0_4, %c0_5] : memref<32x128xf32, #tpu.memory_space<vmem>>, vector<32x128xf32>
    %cst = arith.constant dense<0.000000e+00> : vector<32x128xf32>
    %8 = tpu.matmul %4, %6, %cst {dimension_numbers = #tpu.dot_dimension_numbers<[1], [0], [0], [1], [0, 0, 1, 1], [], []>} : vector<32x128xbf16>, vector<128x128xbf16>, vector<32x128xf32> -> vector<32x128xf32>
    %9 = arith.addf %7, %8 : vector<32x128xf32>
    %c0_6 = arith.constant 0 : index
    %c0_7 = arith.constant 0 : index
    %10 = vector.load %arg7[%c0_6, %c0_7] : memref<32x128xf32, #tpu.memory_space<vmem>>, vector<32x128xf32>
    tpu.vector_store %arg7[%c0_6, %c0_7], %9 {strides = array<i32>} : memref<32x128xf32, #tpu.memory_space<vmem>>, vector<32x128xf32>,
    %c0_i32_8 = arith.constant 0 : i32
    %11 = arith.cmpi eq, %arg2, %c0_i32_8 : i32
    %12 = arith.extui %11 : i1 to i32
    %c0_i32_9 = arith.constant 0 : i32
    %13 = arith.cmpi ne, %12, %c0_i32_9 : i32
    scf.if %13 {
      %c0_10 = arith.constant 0 : index
      %c0_11 = arith.constant 0 : index
      %14 = vector.load %arg7[%c0_10, %c0_11] : memref<32x128xf32, #tpu.memory_space<vmem>>, vector<32x128xf32>
      %c0_12 = arith.constant 0 : index
      %15 = memref.load %arg3[%c0_12] : memref<3xf32, #tpu.memory_space<smem>>
      %16 = vector.broadcast %15 : f32 to vector<32x128xf32>
      %17 = arith.mulf %14, %16 : vector<32x128xf32>
      %c0_13 = arith.constant 0 : index
      %c0_14 = arith.constant 0 : index
      %18 = vector.load %arg6[%c0_13, %c0_14] : memref<1x128xf32, #tpu.memory_space<vmem>>, vector<1x128xf32>
      %19 = vector.broadcast %18 : vector<1x128xf32> to vector<32x128xf32>
      %20 = arith.addf %17, %19 : vector<32x128xf32>
      %c1 = arith.constant 1 : index
      %21 = memref.load %arg3[%c1] : memref<3xf32, #tpu.memory_space<smem>>
      %22 = vector.broadcast %21 : f32 to vector<32x128xf32>
      %23 = arith.mulf %20, %22 : vector<32x128xf32>
      %cst_15 = arith.constant -4.480000e+02 : f32
      %cst_16 = arith.constant 4.480000e+02 : f32
      %24 = vector.broadcast %cst_15 : f32 to vector<32x128xf32>
      %25 = arith.maximumf %24, %23 : vector<32x128xf32>
      %26 = vector.broadcast %cst_16 : f32 to vector<32x128xf32>
      %27 = arith.minimumf %26, %25 : vector<32x128xf32>
      %28 = arith.truncf %27 : vector<32x128xf32> to vector<32x128xf8E4M3FN>
      %29 = arith.extf %28 : vector<32x128xf8E4M3FN> to vector<32x128xf32>
      %c2 = arith.constant 2 : index
      %30 = memref.load %arg3[%c2] : memref<3xf32, #tpu.memory_space<smem>>
      %31 = vector.broadcast %30 : f32 to vector<32x128xf32>
      %32 = arith.mulf %29, %31 : vector<32x128xf32>
      %c0_17 = arith.constant 0 : index
      %c0_18 = arith.constant 0 : index
      %33 = vector.load %arg7[%c0_17, %c0_18] : memref<32x128xf32, #tpu.memory_space<vmem>>, vector<32x128xf32>
      tpu.vector_store %arg7[%c0_17, %c0_18], %32 {strides = array<i32>} : memref<32x128xf32, #tpu.memory_space<vmem>>, vector<32x128xf32>,
    } else {
    }
    return
  }
  func.func @transform_0(%arg0: i32, %arg1: i32, %arg2: i32) -> i32 {
    %c0_i32 = arith.constant 0 : i32
    %c0_i32_0 = arith.constant 0 : i32
    return %c0_i32 : i32
  }
  func.func @transform_1(%arg0: i32, %arg1: i32, %arg2: i32) -> (i32, i32) {
    %c0_i32 = arith.constant 0 : i32
    return %arg0, %arg2 : i32, i32
  }
  func.func @transform_2(%arg0: i32, %arg1: i32, %arg2: i32) -> (i32, i32) {
    %c0_i32 = arith.constant 0 : i32
    return %arg2, %arg1 : i32, i32
  }
  func.func @transform_3(%arg0: i32, %arg1: i32, %arg2: i32) -> (i32, i32) {
    %c0_i32 = arith.constant 0 : i32
    %c0_i32_0 = arith.constant 0 : i32
    return %c0_i32, %arg1 : i32, i32
  }
  func.func @transform_4(%arg0: i32, %arg1: i32, %arg2: i32) -> (i32, i32) {
    %c0_i32 = arith.constant 0 : i32
    return %arg0, %arg1 : i32, i32
  }
}

</mosaic_0001>

<llo_original>
// kernel: tpu_custom_call.1
$region0: #{tpu_custom_call.1}
  #allocation0 [shape = 'u32[]', space=smem, size = 0x4, offset = 0x4, fixed_abs, tag = 'smem constant byte address 0x4 - core index']
  #allocation1 [shape = 'u32[144,128]{1,0:T(1,128)}', space=vmem, size = 0x12000, scoped, tag = 'internal scratch']
  %s0 = inlined_call_operand.hbm [shape: f32[3], index: 0, kind: input, shape index: {}]
  %s1 = inlined_call_operand.hbm [shape: f8e4m3fn[32,128], index: 1, kind: input, shape index: {}]
  %s2 = inlined_call_operand.hbm [shape: f8e4m3fn[128,128], index: 2, kind: input, shape index: {}]
  %s3 = inlined_call_operand.vmem [shape: f32[1,128], index: 3, kind: input, shape index: {}]
  %s4 = inlined_call_operand.hbm [shape: f32[32,128], index: 4, kind: output, shape index: {}]
  %s5 = sld [smem:[#allocation0]]
  $region46: #{tpu_custom_call.1} parent=0
    _
  %s7 = ssub.s32 1, %s5
  %s8 = scalar_select 0, %s7, %s5
  $region1: #{tpu_custom_call.1} parent=0
    #allocation2 [shape = 'u8[512]{0}', space=smem, size = 0x200, scoped, tag = 'input window, operand 0, single buffered']
    #allocation3 [shape = 's32[1]{0}', space=sflag, size = 0x4, scoped, tag = 'scoped memory for tpu_custom_call.1']
    #allocation4 [shape = 's32[1]{0}', space=sflag, size = 0x4, scoped, tag = 'scoped memory for tpu_custom_call.1']
    #allocation5 [shape = 's32[1]{0}', space=sflag, size = 0x4, scoped, tag = 'scoped memory for tpu_custom_call.1']
    #allocation6 [shape = 'u8[4096]{0}', space=vmem, size = 0x1000, scoped, tag = 'input window, operand 1, single buffered']
    #allocation7 [shape = 'u8[16384]{0}', space=vmem, size = 0x4000, scoped, tag = 'input window, operand 2, single buffered']
    #allocation8 [shape = 's32[1]{0}', space=sflag, size = 0x4, scoped, tag = 'scoped memory for tpu_custom_call.1']
    #allocation9 [shape = 'u8[16384]{0}', space=vmem, size = 0x4000, scoped, tag = 'output window, operand 0, single buffered']
    %9 = vsyncpa [#allocation5], 0
    %10 = vsyncpa [#allocation3], 0
    %11 = vsyncpa [#allocation8], 0
    %12 = vsyncpa [#allocation4], 0
    // Predicated region
    $region2: #{tpu_custom_call.1} parent=1 // pred_check
      _
    $region3: #{tpu_custom_call.1} parent=1 // pred_check_branch
      %14 = sbr.rel (0) target = $region5
    $region4: #{tpu_custom_call.1} parent=1 // pred_region
      %s16 = ssub.s32 16, 16
      %17 = vsyncadd [#allocation5], %s16
      %20 = dma.hbm_to_smem %s0, 16, [#allocation2], [#allocation5]
    $region5: #{tpu_custom_call.1} parent=1 // pred_fallthru
      _
    // Predicated region
    $region6: #{tpu_custom_call.1} parent=1 // pred_check
      _
    $region7: #{tpu_custom_call.1} parent=1 // pred_check_branch
      %22 = sbr.rel (0) target = $region9
    $region8: #{tpu_custom_call.1} parent=1 // pred_region
      %s24 = ssub.s32 128, 128
      %25 = vsyncadd [#allocation3], %s24
      %s27 = sshll.u32 [#allocation6], 4
      %s28 = int_to_ptr.vmem [resolvable:$true] %s27
      %30 = dma.hbm_to_vmem [thread:$0]  %s1, 128, %s28, [#allocation3]
    $region9: #{tpu_custom_call.1} parent=1 // pred_fallthru
      _
    // Predicated region
    $region10: #{tpu_custom_call.1} parent=1 // pred_check
      _
    $region11: #{tpu_custom_call.1} parent=1 // pred_check_branch
      %32 = sbr.rel (0) target = $region13
    $region12: #{tpu_custom_call.1} parent=1 // pred_region
      %s34 = ssub.s32 512, 512
      %35 = vsyncadd [#allocation8], %s34
      %s36 = sshll.u32 [#allocation7], 4
      %s37 = int_to_ptr.vmem [resolvable:$true] %s36
      %42 = dma.hbm_to_vmem [thread:$0]  %s2, 512, %s37, [#allocation8], 128, 128, 8
    $region13: #{tpu_custom_call.1} parent=1 // pred_fallthru
      _
    // Predicated region
    $region14: #{tpu_custom_call.1} parent=1 // pred_check
      _
    $region15: #{tpu_custom_call.1} parent=1 // pred_check_branch
      %44 = sbr.rel (0) target = $region17
    $region16: #{tpu_custom_call.1} parent=1 // pred_region
      _
    $region17: #{tpu_custom_call.1} parent=1 // pred_fallthru
      _
    // Predicated region
    $region18: #{tpu_custom_call.1} parent=1 // pred_check
      _
    $region19: #{tpu_custom_call.1} parent=1 // pred_check_branch
      %46 = sbr.rel (0) target = $region21
    $region20: #{tpu_custom_call.1} parent=1 // pred_region
      %47 = dma.done [#allocation5], 16
    $region21: #{tpu_custom_call.1} parent=1 // pred_fallthru
      _
    // Predicated region
    $region22: #{tpu_custom_call.1} parent=1 // pred_check
      _
    $region23: #{tpu_custom_call.1} parent=1 // pred_check_branch
      %49 = sbr.rel (0) target = $region25
    $region24: #{tpu_custom_call.1} parent=1 // pred_region
      %50 = dma.done [#allocation3], 128
    $region25: #{tpu_custom_call.1} parent=1 // pred_fallthru
      _
    // Predicated region
    $region26: #{tpu_custom_call.1} parent=1 // pred_check
      _
    $region27: #{tpu_custom_call.1} parent=1 // pred_check_branch
      %52 = sbr.rel (0) target = $region29
    $region28: #{tpu_custom_call.1} parent=1 // pred_region
      %53 = dma.done [#allocation8], 512
    $region29: #{tpu_custom_call.1} parent=1 // pred_fallthru
      _
    %54 = sfence
    %p56 = scmp.eq.s32.totalorder 0, 0
    // Predicated region
    $region30: #{tpu_custom_call.1} parent=1 // pred_check
      %p57 = pneg %p56
    $region31: #{tpu_custom_call.1} parent=1 // pred_check_branch
      %59 = sbr.rel (%p57) target = $region33
    $region32: #{tpu_custom_call.1} parent=1 // pred_region
      %60 = vst [vmem:[#allocation9] sm:$0xff] 0.0
      %61 = vst [vmem:[#allocation9 + $0x8] sm:$0xff] 0.0
      %62 = vst [vmem:[#allocation9 + $0x10] sm:$0xff] 0.0
      %63 = vst [vmem:[#allocation9 + $0x18] sm:$0xff] 0.0
    $region33: #{tpu_custom_call.1} parent=1 // pred_fallthru
      _
    %v64 = vld [vmem:[#allocation6] sm:$0xff]
    %v65 = vunpack.c.l.f8e4m3fn %v64
    %v66 = vunpack.c.h.f8e4m3fn %v64
    %v67 = vld [vmem:[#allocation7] sm:$0xff]
    %v68 = vld [vmem:[#allocation7 + $0x8] sm:$0xff]
    %v69 = vld [vmem:[#allocation7 + $0x10] sm:$0xff]
    %v70 = vld [vmem:[#allocation7 + $0x18] sm:$0xff]
    %v71 = vunpack.c.l.f8e4m3fn %v67
    %v72 = vunpack.c.h.f8e4m3fn %v67
    %v73 = vunpack.c.l.f8e4m3fn %v68
    %v74 = vunpack.c.h.f8e4m3fn %v68
    %v75 = vunpack.c.l.f8e4m3fn %v69
    %v76 = vunpack.c.h.f8e4m3fn %v69
    %v77 = vunpack.c.l.f8e4m3fn %v70
    %v78 = vunpack.c.h.f8e4m3fn %v70
    %v79 = vld [vmem:[#allocation9] sm:$0xff]
    %v80 = vld [vmem:[#allocation9 + $0x8] sm:$0xff]
    %v81 = vld [vmem:[#allocation9 + $0x10] sm:$0xff]
    %v82 = vld [vmem:[#allocation9 + $0x18] sm:$0xff]
    %83 = vmatprep.subr.bf16.mxu0 0
    %84 = vmatpush1.bf16.msra.mxu0 %v71
    %85 = vmatprep.subr.bf16.mxu0 0
    %86 = vmatpush1.bf16.msra.mxu0 %v72
    %87 = vmatprep.subr.bf16.mxu0 0
    %88 = vmatpush1.bf16.msra.mxu0 %v73
    %89 = vmatprep.subr.bf16.mxu0 0
    %90 = vmatpush1.bf16.msra.mxu0 %v74
    %91 = vmatprep.subr.bf16.mxu0 0
    %92 = vmatpush1.bf16.msra.mxu0 %v75
    %93 = vmatprep.subr.bf16.mxu0 0
    %94 = vmatpush1.bf16.msra.mxu0 %v76
    %95 = vmatprep.subr.bf16.mxu0 0
    %96 = vmatpush1.bf16.msra.mxu0 %v77
    %97 = vmatprep.subr.bf16.mxu0 0
    %98 = vmatpush1.bf16.msra.mxu0 %v78
    %99 = vmatprep.subr.bf16.mxu0 0
    %100 = vmatpush1.bf16.msra.mxu0 0
    %101 = vmatprep.subr.bf16.mxu0 0
    %102 = vmatpush1.bf16.msra.mxu0 0
    %103 = vmatprep.subr.bf16.mxu0 0
    %104 = vmatpush1.bf16.msra.mxu0 0
    %105 = vmatprep.subr.bf16.mxu0 0
    %106 = vmatpush1.bf16.msra.mxu0 0
    %107 = vmatprep.subr.bf16.mxu0 0
    %108 = vmatpush1.bf16.msra.mxu0 0
    %109 = vmatprep.subr.bf16.mxu0 0
    %110 = vmatpush1.bf16.msra.mxu0 0
    %111 = vmatprep.subr.bf16.mxu0 0
    %112 = vmatpush1.bf16.msra.mxu0 0
    %113 = vmatprep.subr.bf16.mxu0 0
    %114 = vmatpush1.bf16.msra.mxu0 0
    %115 = vmatprep.mubr.bf16.mxu0 0
    %116 = vmatmul.mubr.bf16.gmra.mrb[0].mxu0 %v65
    %v117 = vpop.f32.mrb[0].mxu0
    %v118 = vadd.f32 0.0, %v117
    %v119 = vpop.f32.mrb[0].mxu0
    %v120 = vpop.f32.mrb[0].mxu0
    %v121 = vadd.f32 0.0, %v120
    %v122 = vpop.f32.mrb[0].mxu0
    %123 = vmatprep.mubr.bf16.mxu0 0
    %124 = vmatmul.mubr.bf16.gmra.mrb[0].mxu0 %v66
    %v125 = vpop.f32.mrb[0].mxu0
    %v126 = vadd.f32 0.0, %v125
    %v127 = vpop.f32.mrb[0].mxu0
    %v128 = vpop.f32.mrb[0].mxu0
    %v129 = vadd.f32 0.0, %v128
    %v130 = vpop.f32.mrb[0].mxu0
    %131 = vdwg.mxu0
    %v132 = vadd.f32 %v79, %v118
    %v133 = vadd.f32 %v80, %v121
    %v134 = vadd.f32 %v81, %v126
    %v135 = vadd.f32 %v82, %v129
    %136 = vst [vmem:[#allocation9] sm:$0xff] %v132
    %137 = vst [vmem:[#allocation9 + $0x8] sm:$0xff] %v133
    %138 = vst [vmem:[#allocation9 + $0x10] sm:$0xff] %v134
    %139 = vst [vmem:[#allocation9 + $0x18] sm:$0xff] %v135
    // Predicated region
    $region34: #{tpu_custom_call.1} parent=1 // pred_check
      %p140 = pneg %p56
    $region35: #{tpu_custom_call.1} parent=1 // pred_check_branch
      %142 = sbr.rel (%p140) target = $region37
    $region36: #{tpu_custom_call.1} parent=1 // pred_region
      %v143 = vld [vmem:[#allocation9] sm:$0xff]
      %v144 = vld [vmem:[#allocation9 + $0x8] sm:$0xff]
      %v145 = vld [vmem:[#allocation9 + $0x10] sm:$0xff]
      %v146 = vld [vmem:[#allocation9 + $0x18] sm:$0xff]
      %s147 = sld [smem:[#allocation2]]
      %v148 = vstv %s147
      %v149 = vmul.f32 %v143, %v148
      %v150 = vmul.f32 %v144, %v148
      %v151 = vmul.f32 %v145, %v148
      %v152 = vmul.f32 %v146, %v148
      %v153 = vld [vmem:[%s3] sm:$0x1]
      %v155 = vlaneseq
      %v156 = vshrl.u32 %v155, 7
      %v157 = vsub.s32 0, %v156
      %v158 = vrot.slane %v153, %v157
      %v160 = vadd.f32 %v149, %v158
      %v161 = vadd.f32 %v150, %v158
      %v162 = vadd.f32 %v151, %v158
      %v163 = vadd.f32 %v152, %v158
      %s164 = sld [smem:[#allocation2 + $0x1]]
      %v165 = vstv %s164
      %v166 = vmul.f32 %v160, %v165
      %v167 = vmul.f32 %v161, %v165
      %v168 = vmul.f32 %v162, %v165
      %v169 = vmul.f32 %v163, %v165
      %v170 = vmax.f32 %v166, -448.0
      %v171 = vmax.f32 %v167, -448.0
      %v172 = vmax.f32 %v168, -448.0
      %v173 = vmax.f32 %v169, -448.0
      %v174 = vmin.f32 %v170, 448.0
      %v175 = vmin.f32 %v171, 448.0
      %v176 = vmin.f32 %v172, 448.0
      %v177 = vmin.f32 %v173, 448.0
      %v178 = vpack.c.f32.eXmY %v174, %v175, 61788
      %v182 = vpack.c.f32.eXmY %v176, %v177, 61788
      %v186 = vpack.c.b8 %v182, %v178
      %v188 = vunpack.c.0.f8e4m3fn %v186
      %v189 = vunpack.c.1.f8e4m3fn %v186
      %v190 = vunpack.c.2.f8e4m3fn %v186
      %v191 = vunpack.c.3.f8e4m3fn %v186
      %s192 = sld [smem:[#allocation2 + $0x2]]
      %v193 = vstv %s192
      %v194 = vmul.f32 %v188, %v193
      %v195 = vmul.f32 %v189, %v193
      %v196 = vmul.f32 %v190, %v193
      %v197 = vmul.f32 %v191, %v193
      %198 = vst [vmem:[#allocation9] sm:$0xff] %v194
      %199 = vst [vmem:[#allocation9 + $0x8] sm:$0xff] %v195
      %200 = vst [vmem:[#allocation9 + $0x10] sm:$0xff] %v196
      %201 = vst [vmem:[#allocation9 + $0x18] sm:$0xff] %v197
    $region37: #{tpu_custom_call.1} parent=1 // pred_fallthru
      _
    // Predicated region
    $region38: #{tpu_custom_call.1} parent=1 // pred_check
      _
    $region39: #{tpu_custom_call.1} parent=1 // pred_check_branch
      %203 = sbr.rel (0) target = $region41
    $region40: #{tpu_custom_call.1} parent=1 // pred_region
      %s205 = ssub.s32 512, 512
      %206 = vsyncadd [#allocation4], %s205
      %s207 = sshll.u32 [#allocation9], 4
      %s208 = int_to_ptr.vmem [resolvable:$true] %s207
      %213 = dma.vmem_to_hbm [thread:$0]  %s208, 512, %s4, [#allocation4], 128, 128, 8
    $region41: #{tpu_custom_call.1} parent=1 // pred_fallthru
      _
    // Predicated region
    $region42: #{tpu_custom_call.1} parent=1 // pred_check
      _
    $region43: #{tpu_custom_call.1} parent=1 // pred_check_branch
      %215 = sbr.rel (0) target = $region45
    $region44: #{tpu_custom_call.1} parent=1 // pred_region
      %216 = dma.done [#allocation4], 512
    $region45: #{tpu_custom_call.1} parent=1 // pred_fallthru
      _
    %217 = vsyncpa [#allocation3], 1
    %218 = vsyncpa [#allocation8], 1
    %219 = vsyncpa [#allocation4], 1
    %220 = vsyncpa [#allocation5], 1

</llo_original>
